<compile_context>
chip_gen: v6e
topology: v6e:2x2x1
jax: 0.10.0
libtpu: 0.0.40
codegen_flags: <defaults>
</compile_context>

<pallas_src>
import numpy as np
import jax
import jax.numpy as jnp
from jax.experimental import pallas as pl
from jax.experimental.pallas import tpu as pltpu

LN_EPS = 1e-5  # PyTorch nn.LayerNorm default


# ----------------------------------------------------------------------------
# Precompute: structure encodings (mirrors compute_structure_encodings)
# ----------------------------------------------------------------------------
def _mode(a):
    # torch.mode returns the smallest of the most frequent values
    vals, counts = np.unique(a, return_counts=True)
    return vals[counts == counts.max()].min()


def compute_structure_encodings(H_dense):
    """H_dense: (n_nodes, n_edges) 0/1 incidence matrix (numpy) -> (n_nodes, 6)."""
    n_nodes, _ = H_dense.shape
    node_degree = H_dense.sum(axis=1).astype(np.float32)
    edge_degree = H_dense.sum(axis=0).astype(np.float32)
    node_idx, edge_idx = np.nonzero(H_dense)  # coalesced (row-major) COO order
    edge_sizes = edge_degree[edge_idx]

    g_max = edge_sizes.max()
    g_min = edge_sizes.min()
    g_mean = edge_sizes.mean()
    g_mode = _mode(edge_sizes)
    g_var = edge_sizes.var(ddof=1) if len(edge_sizes) > 1 else 0.0

    enc = np.zeros((n_nodes, 6), dtype=np.float32)
    for i in range(node_idx.max() + 1):
        local = edge_sizes[node_idx == i]
        if len(local) == 0:
            # TODO(synk): empty-node fill branch of the reference uses a buggy
            # integer-tensor ~ index; synthetic H guarantees no empty nodes.
            continue
        loc_var = (local.var(ddof=1) - g_var) if len(local) > 1 else -g_var
        enc[i] = np.array(
            [
                node_degree[i],
                local.max() - g_max,
                local.min() - g_min,
                local.mean() - g_mean,
                _mode(local) - g_mode,
                loc_var,
            ],
            dtype=np.float32,
        )
    return enc


# ----------------------------------------------------------------------------
# Parameter folding: LayerNorm affine + Linear bias -> projection
# ----------------------------------------------------------------------------
def fold_layernorm_into_proj(gamma, beta, proj_w, proj_b):
    """proj(LN(x)) = (xhat*gamma + beta) @ W^T + b = xhat @ (W*gamma)^T + (W@beta + b).

    gamma, beta: (F,); proj_w: (S, F); proj_b: (S,)
    Returns w_eff (S, F) and b_eff (1, S) ready for the kernel.
    """
    w_eff = (proj_w * gamma[None, :]).astype(jnp.float32)               # (S, F)
    b_eff = (proj_b + proj_w @ beta).reshape(1, -1).astype(jnp.float32)  # (1, S)
    return w_eff, b_eff


# ----------------------------------------------------------------------------
# Pallas kernel: fused LayerNorm(F) + Linear(F -> S)
# ----------------------------------------------------------------------------
def _ln_proj_kernel(x_ref, w_ref, b_ref, o_ref):
    """x_ref: (F, tn) encodings^T block; w_ref: (S, F); b_ref: (1, S); o_ref: (tn, S)."""
    x = x_ref[...]                            # f32, nodes on the lane axis
    f_dim = x.shape[0]
    inv_f = 1.0 / f_dim

    # LayerNorm over the feature dim == reduction over the F sublane rows.
    # F is tiny (6) and static -> unrolled VPU adds, no cross-sublane reduce,
    # and the padding sublanes of the (6, tn) tile are never touched.
    s = x[0:1, :]
    for f in range(1, f_dim):
        s = s + x[f:f + 1, :]
    mean = s * inv_f                          # (1, tn)
    xc = x - mean                             # sublane-broadcast subtract
    sq = xc * xc
    v = sq[0:1, :]
    for f in range(1, f_dim):
        v = v + sq[f:f + 1, :]
    var = v * inv_f                           # biased variance (torch LayerNorm)
    xn = xc * jax.lax.rsqrt(var + LN_EPS)     # (F, tn)

    # gamma/beta and the Linear bias are pre-folded into w_ref / b_ref.
    y = jnp.dot(w_ref[...], xn, preferred_element_type=jnp.float32)   # (S, tn)
    # In-kernel transpose (XLU, hidden under DMA) so the output lands directly
    # in the module's (n_nodes, se_dim) orientation -- no wrapper transpose op.
    o_ref[...] = y.T + b_ref[...]             # (tn, S) + (1, S) sublane-broadcast


def _round_up(x, m):
    return ((x + m - 1) // m) * m


def hypergraph_se_forward(encodings, w_eff, b_eff, *, tn=4096):
    """Fused LayerNorm + projection.

    encodings : (N, F) float32  -- structure encodings (module buffer layout).
    w_eff     : (S, F) float32  -- LN-gamma-folded projection weight.
    b_eff     : (1, S) float32  -- LN-beta/bias-folded projection bias.
    Returns (N, S) float32, matching the module's output orientation.
    """
    N, F = encodings.shape
    S = w_eff.shape[0]

    # Tiny layout plumbing: put nodes on the lane axis (F=6, so this is only
    # 24 B/node and can be hoisted/cached by callers since encodings is a
    # constant buffer computed in __init__).
    enc_t = encodings.T                                   # (F, N)

    # Node tile: lane-dense (multiple of 128); sweepable.
    n128 = _round_up(max(N, 1), 128)
    tn_eff = min(_round_up(tn, 128), n128)
    # v7x has 2 TensorCores: keep >= 2 "parallel" grid steps when possible.
    if n128 >= 2 * 128 and n128 <= tn_eff:
        tn_eff = _round_up(pl.cdiv(n128, 2), 128)
    n_pad = _round_up(n128, tn_eff)
    grid_steps = n_pad // tn_eff

    if n_pad != N:
        # Zero-pad tail nodes: LN of a zero column is finite (var + eps > 0),
        # and the padded outputs are sliced off below.
        enc_t = jnp.pad(enc_t, ((0, 0), (0, n_pad - N)))

    out = pl.pallas_call(
        _ln_proj_kernel,
        out_shape=jax.ShapeDtypeStruct((n_pad, S), jnp.float32),
        grid=(grid_steps,),
        in_specs=[
            pl.BlockSpec((F, tn_eff), lambda i: (0, i)),   # lane-dense input
            pl.BlockSpec((S, F), lambda i: (0, 0)),        # resident weight
            pl.BlockSpec((1, S), lambda i: (0, 0)),        # resident bias
        ],
        out_specs=pl.BlockSpec((tn_eff, S), lambda i: (i, 0)),  # natural (N, S) layout
        compiler_params=pltpu.CompilerParams(
            dimension_semantics=("parallel",),
        ),
        cost_estimate=pl.CostEstimate(
            flops=2 * N * F * S,
            transcendentals=N,
            bytes_accessed=4 * (N * F + N * S + S * F + S),
        ),
    )(enc_t, w_eff, b_eff)

    return out[:N]


# ----------------------------------------------------------------------------
# Reference (plain JAX, un-folded) for verification
# ----------------------------------------------------------------------------
def reference_forward(encodings, gamma, beta, proj_w, proj_b):
    mean = jnp.mean(encodings, axis=-1, keepdims=True)
    var = jnp.mean((encodings - mean) ** 2, axis=-1, keepdims=True)
    xn = (encodings - mean) * jax.lax.rsqrt(var + LN_EPS)
    y = xn * gamma + beta
    return y @ proj_w.T + proj_b


if __name__ == "__main__":
    # --- synthetic hypergraph (deterministic) --------------------------------
    n_nodes, n_edges = 16, 8
    H = np.zeros((n_nodes, n_edges), dtype=np.float32)
    for i in range(n_nodes):
        # every node belongs to 2-3 hyperedges; deterministic rule
        H[i, i % n_edges] = 1.0
        H[i, (i * 3 + 1) % n_edges] = 1.0
        if i % 2 == 0:
            H[i, (i + 5) % n_edges] = 1.0

    encodings_np = compute_structure_encodings(H)          # (16, 6)
    n_feat = encodings_np.shape[1]                          # len(stats) + 1 = 6
    se_dim = 32

    # --- parameters (PyTorch shapes; non-trivial gamma/beta exercise the fold)
    key = jax.random.PRNGKey(0)
    k_w, k_b, k_g, k_be, k_x = jax.random.split(key, 5)
    bound = 1.0 / np.sqrt(n_feat)
    proj_w = jax.random.uniform(k_w, (se_dim, n_feat), jnp.float32, -bound, bound)
    proj_b = jax.random.uniform(k_b, (se_dim,), jnp.float32, -bound, bound)
    gamma = 1.0 + 0.1 * jax.random.normal(k_g, (n_feat,), jnp.float32)
    beta = 0.1 * jax.random.normal(k_be, (n_feat,), jnp.float32)

    w_eff, b_eff = fold_layernorm_into_proj(gamma, beta, proj_w, proj_b)

    # --- case 1: real structure encodings (small) ----------------------------
    enc = jnp.asarray(encodings_np)                                    # (16, 6)
    out = jax.block_until_ready(hypergraph_se_forward(enc, w_eff, b_eff))
    ref = jax.block_until_ready(reference_forward(enc, gamma, beta, proj_w, proj_b))
    np.testing.assert_allclose(np.asarray(out), np.asarray(ref), rtol=1e-5, atol=1e-4)

    # --- case 2: larger N exercising padding + a multi-step parallel grid ----
    n_big = 1000
    enc_big = jax.random.normal(k_x, (n_big, n_feat), jnp.float32) * 3.0
    out_big = jax.block_until_ready(
        hypergraph_se_forward(enc_big, w_eff, b_eff, tn=512))
    ref_big = jax.block_until_ready(
        reference_forward(enc_big, gamma, beta, proj_w, proj_b))
    np.testing.assert_allclose(np.asarray(out_big), np.asarray(ref_big),
                               rtol=1e-5, atol=1e-4)

    print("KERNEL_OK")
</pallas_src>

<mosaic_0001>
module attributes {stable_mosaic.version = 11 : i64} {
  func.func @_ln_proj_kernel(%arg0: i32, %arg1: memref<6x128xf32, #tpu.memory_space<vmem>>, %arg2: memref<32x6xf32, #tpu.memory_space<vmem>>, %arg3: memref<1x32xf32, #tpu.memory_space<vmem>>, %arg4: memref<128x32xf32, #tpu.memory_space<vmem>>) attributes {dimension_semantics = [#tpu.dimension_semantics<parallel>], iteration_bounds = array<i64: 1>, scalar_prefetch = 0 : i64, scratch_operands = 0 : i64, tpu.core_type = #tpu.core_type<tc>, window_params = [{transform_indices = @transform_0, window_bounds = array<i64: 6, 128>}, {pipeline_mode = #tpu.pipeline_mode<synchronous>, transform_indices = @transform_1, window_bounds = array<i64: 32, 6>}, {pipeline_mode = #tpu.pipeline_mode<synchronous>, transform_indices = @transform_2, window_bounds = array<i64: 1, 32>}, {transform_indices = @transform_3, window_bounds = array<i64: 128, 32>}]} {
    %c0 = arith.constant 0 : index
    %c0_0 = arith.constant 0 : index
    %0 = vector.load %arg1[%c0, %c0_0] : memref<6x128xf32, #tpu.memory_space<vmem>>, vector<6x128xf32>
    %1 = vector.extract_strided_slice %0 {offsets = [0, 0], sizes = [1, 128], strides = [1, 1]} : vector<6x128xf32> to vector<1x128xf32>
    %2 = vector.extract_strided_slice %0 {offsets = [1, 0], sizes = [1, 128], strides = [1, 1]} : vector<6x128xf32> to vector<1x128xf32>
    %3 = arith.addf %1, %2 : vector<1x128xf32>
    %4 = vector.extract_strided_slice %0 {offsets = [2, 0], sizes = [1, 128], strides = [1, 1]} : vector<6x128xf32> to vector<1x128xf32>
    %5 = arith.addf %3, %4 : vector<1x128xf32>
    %6 = vector.extract_strided_slice %0 {offsets = [3, 0], sizes = [1, 128], strides = [1, 1]} : vector<6x128xf32> to vector<1x128xf32>
    %7 = arith.addf %5, %6 : vector<1x128xf32>
    %8 = vector.extract_strided_slice %0 {offsets = [4, 0], sizes = [1, 128], strides = [1, 1]} : vector<6x128xf32> to vector<1x128xf32>
    %9 = arith.addf %7, %8 : vector<1x128xf32>
    %10 = vector.extract_strided_slice %0 {offsets = [5, 0], sizes = [1, 128], strides = [1, 1]} : vector<6x128xf32> to vector<1x128xf32>
    %11 = arith.addf %9, %10 : vector<1x128xf32>
    %cst = arith.constant 0.166666672 : f32
    %12 = vector.broadcast %cst : f32 to vector<1x128xf32>
    %13 = arith.mulf %11, %12 : vector<1x128xf32>
    %14 = vector.broadcast %13 : vector<1x128xf32> to vector<6x128xf32>
    %15 = arith.subf %0, %14 : vector<6x128xf32>
    %16 = arith.mulf %15, %15 : vector<6x128xf32>
    %17 = vector.extract_strided_slice %16 {offsets = [0, 0], sizes = [1, 128], strides = [1, 1]} : vector<6x128xf32> to vector<1x128xf32>
    %18 = vector.extract_strided_slice %16 {offsets = [1, 0], sizes = [1, 128], strides = [1, 1]} : vector<6x128xf32> to vector<1x128xf32>
    %19 = arith.addf %17, %18 : vector<1x128xf32>
    %20 = vector.extract_strided_slice %16 {offsets = [2, 0], sizes = [1, 128], strides = [1, 1]} : vector<6x128xf32> to vector<1x128xf32>
    %21 = arith.addf %19, %20 : vector<1x128xf32>
    %22 = vector.extract_strided_slice %16 {offsets = [3, 0], sizes = [1, 128], strides = [1, 1]} : vector<6x128xf32> to vector<1x128xf32>
    %23 = arith.addf %21, %22 : vector<1x128xf32>
    %24 = vector.extract_strided_slice %16 {offsets = [4, 0], sizes = [1, 128], strides = [1, 1]} : vector<6x128xf32> to vector<1x128xf32>
    %25 = arith.addf %23, %24 : vector<1x128xf32>
    %26 = vector.extract_strided_slice %16 {offsets = [5, 0], sizes = [1, 128], strides = [1, 1]} : vector<6x128xf32> to vector<1x128xf32>
    %27 = arith.addf %25, %26 : vector<1x128xf32>
    %cst_1 = arith.constant 0.166666672 : f32
    %28 = vector.broadcast %cst_1 : f32 to vector<1x128xf32>
    %29 = arith.mulf %27, %28 : vector<1x128xf32>
    %cst_2 = arith.constant 9.99999974E-6 : f32
    %30 = vector.broadcast %cst_2 : f32 to vector<1x128xf32>
    %31 = arith.addf %29, %30 : vector<1x128xf32>
    %32 = math.rsqrt %31 : vector<1x128xf32>
    %33 = vector.broadcast %32 : vector<1x128xf32> to vector<6x128xf32>
    %34 = arith.mulf %15, %33 : vector<6x128xf32>
    %c0_3 = arith.constant 0 : index
    %c0_4 = arith.constant 0 : index
    %35 = vector.load %arg2[%c0_3, %c0_4] : memref<32x6xf32, #tpu.memory_space<vmem>>, vector<32x6xf32>
    %cst_5 = arith.constant dense<0.000000e+00> : vector<32x128xf32>
    %36 = tpu.matmul %35, %34, %cst_5 {dimension_numbers = #tpu.dot_dimension_numbers<[1], [0], [0], [1], [0, 0, 1, 1], [], []>} : vector<32x6xf32>, vector<6x128xf32>, vector<32x128xf32> -> vector<32x128xf32>
    %37 = tpu.transpose %36, [1, 0] : vector<32x128xf32> -> vector<128x32xf32>
    %c0_6 = arith.constant 0 : index
    %c0_7 = arith.constant 0 : index
    %38 = vector.load %arg3[%c0_6, %c0_7] : memref<1x32xf32, #tpu.memory_space<vmem>>, vector<1x32xf32>
    %39 = vector.broadcast %38 : vector<1x32xf32> to vector<128x32xf32>
    %40 = arith.addf %37, %39 : vector<128x32xf32>
    %c0_8 = arith.constant 0 : index
    %c0_9 = arith.constant 0 : index
    %41 = vector.load %arg4[%c0_8, %c0_9] : memref<128x32xf32, #tpu.memory_space<vmem>>, vector<128x32xf32>
    tpu.vector_store %arg4[%c0_8, %c0_9], %40 {strides = array<i32>} : memref<128x32xf32, #tpu.memory_space<vmem>>, vector<128x32xf32>,
    return
  }
  func.func @transform_0(%arg0: i32) -> (i32, i32) {
    %c0_i32 = arith.constant 0 : i32
    %c0_i32_0 = arith.constant 0 : i32
    return %c0_i32, %arg0 : i32, i32
  }
  func.func @transform_1(%arg0: i32) -> (i32, i32) {
    %c0_i32 = arith.constant 0 : i32
    %c0_i32_0 = arith.constant 0 : i32
    %c0_i32_1 = arith.constant 0 : i32
    return %c0_i32, %c0_i32_0 : i32, i32
  }
  func.func @transform_2(%arg0: i32) -> (i32, i32) {
    %c0_i32 = arith.constant 0 : i32
    %c0_i32_0 = arith.constant 0 : i32
    %c0_i32_1 = arith.constant 0 : i32
    return %c0_i32, %c0_i32_0 : i32, i32
  }
  func.func @transform_3(%arg0: i32) -> (i32, i32) {
    %c0_i32 = arith.constant 0 : i32
    %c0_i32_0 = arith.constant 0 : i32
    return %arg0, %c0_i32 : i32, i32
  }
}

</mosaic_0001>

<llo_original>
// kernel: tpu_custom_call.1
$region0: #{tpu_custom_call.1}
  #allocation0 [shape = 'u32[]', space=smem, size = 0x4, offset = 0x4, fixed_abs, tag = 'smem constant byte address 0x4 - core index']
  #allocation1 [shape = 'u32[144,128]{1,0:T(1,128)}', space=vmem, size = 0x12000, scoped, tag = 'internal scratch']
  %s0 = inlined_call_operand.vmem [shape: f32[6,128], index: 0, kind: input, shape index: {}]
  %s1 = inlined_call_operand.vmem [shape: f32[32,6], index: 1, kind: input, shape index: {}]
  %s2 = inlined_call_operand.vmem [shape: f32[1,32], index: 2, kind: input, shape index: {}]
  %s3 = inlined_call_operand.vmem [shape: f32[128,32], index: 3, kind: output, shape index: {}]
  %s4 = sld [smem:[#allocation0]]
  $region22: #{tpu_custom_call.1} parent=0
    _
  %s6 = ssub.s32 1, %s4
  %s7 = scalar_select 0, %s6, %s4
  // Predicated region
  $region2: #{tpu_custom_call.1} parent=0 // pred_check
    _
  $region3: #{tpu_custom_call.1} parent=0 // pred_check_branch
    %9 = sbr.rel (0) target = $region5
  $region4: #{tpu_custom_call.1} parent=0 // pred_region
    _
  $region5: #{tpu_custom_call.1} parent=0 // pred_fallthru
    _
  // Predicated region
  $region6: #{tpu_custom_call.1} parent=0 // pred_check
    _
  $region7: #{tpu_custom_call.1} parent=0 // pred_check_branch
    %11 = sbr.rel (0) target = $region9
  $region8: #{tpu_custom_call.1} parent=0 // pred_region
    _
  $region9: #{tpu_custom_call.1} parent=0 // pred_fallthru
    _
  // Predicated region
  $region10: #{tpu_custom_call.1} parent=0 // pred_check
    _
  $region11: #{tpu_custom_call.1} parent=0 // pred_check_branch
    %13 = sbr.rel (0) target = $region13
  $region12: #{tpu_custom_call.1} parent=0 // pred_region
    _
  $region13: #{tpu_custom_call.1} parent=0 // pred_fallthru
    _
  %v14 = vld [vmem:[%s0] sm:$0x3f]
  %v16 = vrot.slane %v14, 1
  %v18 = vadd.f32 %v14, %v16
  %v19 = vrot.slane %v14, 2
  %v21 = vadd.f32 %v18, %v19
  %v22 = vrot.slane %v14, 3
  %v24 = vadd.f32 %v21, %v22
  %v25 = vrot.slane %v14, 4
  %v27 = vadd.f32 %v24, %v25
  %v28 = vrot.slane %v14, 5
  %v30 = vadd.f32 %v27, %v28
  %v31 = vmul.f32 %v30, 0.16666667
  %v32 = vlaneseq
  %v33 = vshrl.u32 %v32, 7
  %v34 = vsub.s32 0, %v33
  %v35 = vrot.slane %v31, %v34
  %v36 = vsub.f32 %v14, %v35
  %v37 = vmul.f32 %v36, %v36
  %v39 = vrot.slane %v37, 1
  %v41 = vadd.f32 %v37, %v39
  %v42 = vrot.slane %v37, 2
  %v44 = vadd.f32 %v41, %v42
  %v45 = vrot.slane %v37, 3
  %v47 = vadd.f32 %v44, %v45
  %v48 = vrot.slane %v37, 4
  %v50 = vadd.f32 %v47, %v48
  %v51 = vrot.slane %v37, 5
  %v53 = vadd.f32 %v50, %v51
  %v54 = vmul.f32 %v53, 0.16666667
  %v55 = vadd.f32 %v54, 1e-05
  %v56 = vrsqrt.pop %v55
  %v57 = vlaneseq
  %v58 = vshrl.u32 %v57, 7
  %v59 = vsub.s32 0, %v58
  %v60 = vrot.slane %v56, %v59
  %v61 = vmul.f32 %v36, %v60
  %v62 = vld [vmem:[%s1] sm:$0xff]
  %v63 = vld [vmem:[%s1 + $0x8] sm:$0xff]
  %v64 = vld [vmem:[%s1 + $0x10] sm:$0xff]
  %v65 = vld [vmem:[%s1 + $0x18] sm:$0xff]
  %vm66 = vcmask 48128
  %v68 = vsel %vm66, %v62, 0
  %v71 = vsel %vm66, %v63, 0
  %v74 = vsel %vm66, %v64, 0
  %v77 = vsel %vm66, %v65, 0
  %vm79 = vcmask 1045504
  %v81 = vsel %vm79, %v61, 0
  %83 = vmatprep.subr.mxu0 0.0
  %84 = vmatpush1.msra.mxu0 0.0
  %85 = vmatprep.subr.mxu0 0.0
  %86 = vmatpush1.msra.mxu0 0.0
  %87 = vmatprep.subr.mxu0 0.0
  %88 = vmatpush1.msra.mxu0 0.0
  %89 = vmatprep.subr.mxu0 0.0
  %90 = vmatpush1.msra.mxu0 0.0
  %91 = vmatprep.subr.mxu0 0.0
  %92 = vmatpush1.msra.mxu0 0.0
  %93 = vmatprep.subr.mxu0 0.0
  %94 = vmatpush1.msra.mxu0 0.0
  %95 = vmatprep.subr.mxu0 0.0
  %96 = vmatpush1.msra.mxu0 0.0
  %97 = vmatprep.subr.mxu0 0.0
  %98 = vmatpush1.msra.mxu0 0.0
  %99 = vmatprep.subr.mxu0 0.0
  %100 = vmatpush1.msra.mxu0 0.0
  %101 = vmatprep.subr.mxu0 0.0
  %102 = vmatpush1.msra.mxu0 0.0
  %103 = vmatprep.subr.mxu0 0.0
  %104 = vmatpush1.msra.mxu0 0.0
  %105 = vmatprep.subr.mxu0 0.0
  %106 = vmatpush1.msra.mxu0 0.0
  %107 = vmatprep.subr.mxu0 0.0
  %108 = vmatpush1.msra.mxu0 0.0
  %109 = vmatprep.subr.mxu0 0.0
  %110 = vmatpush1.msra.mxu0 0.0
  %111 = vmatprep.subr.mxu0 0.0
  %112 = vmatpush1.msra.mxu0 0.0
  %113 = vmatprep.subr.mxu0 0.0
  %114 = vmatpush1.msra.mxu0 %v81
  %115 = vmatprep.subr.mxu0 0.0
  %116 = vmatpush2.msra.mxu0 0.0
  %117 = vmatprep.subr.mxu0 0.0
  %118 = vmatpush2.msra.mxu0 0.0
  %119 = vmatprep.subr.mxu0 0.0
  %120 = vmatpush2.msra.mxu0 0.0
  %121 = vmatprep.subr.mxu0 0.0
  %122 = vmatpush2.msra.mxu0 0.0
  %123 = vmatprep.subr.mxu0 0.0
  %124 = vmatpush2.msra.mxu0 0.0
  %125 = vmatprep.subr.mxu0 0.0
  %126 = vmatpush2.msra.mxu0 0.0
  %127 = vmatprep.subr.mxu0 0.0
  %128 = vmatpush2.msra.mxu0 0.0
  %129 = vmatprep.subr.mxu0 0.0
  %130 = vmatpush2.msra.mxu0 0.0
  %131 = vmatprep.subr.mxu0 0.0
  %132 = vmatpush2.msra.mxu0 0.0
  %133 = vmatprep.subr.mxu0 0.0
  %134 = vmatpush2.msra.mxu0 0.0
  %135 = vmatprep.subr.mxu0 0.0
  %136 = vmatpush2.msra.mxu0 0.0
  %137 = vmatprep.subr.mxu0 0.0
  %138 = vmatpush2.msra.mxu0 0.0
  %139 = vmatprep.subr.mxu0 0.0
  %140 = vmatpush2.msra.mxu0 0.0
  %141 = vmatprep.subr.mxu0 0.0
  %142 = vmatpush2.msra.mxu0 0.0
  %143 = vmatprep.subr.mxu0 0.0
  %144 = vmatpush2.msra.mxu0 0.0
  %145 = vmatprep.subr.mxu0 0.0
  %146 = vmatpush2.msra.mxu0 0.0
  %147 = vmatprep.mubr.f32.mxu0 0.0
  %148 = vmatmul.mubr.f32.gmra.mxu0 %v68
  %v149 = vpop.f32.mrf.mxu0
  %v150 = vadd.f32 0.0, %v149
  %v151 = vpop.f32.mrf.mxu0
  %152 = vmatprep.mubr.f32.mxu0 0.0
  %153 = vmatmul.mubr.f32.gmra.mxu0 %v71
  %v154 = vpop.f32.mrf.mxu0
  %v155 = vadd.f32 0.0, %v154
  %v156 = vpop.f32.mrf.mxu0
  %157 = vmatprep.mubr.f32.mxu0 0.0
  %158 = vmatmul.mubr.f32.gmra.mxu0 %v74
  %v159 = vpop.f32.mrf.mxu0
  %v160 = vadd.f32 0.0, %v159
  %v161 = vpop.f32.mrf.mxu0
  %162 = vmatprep.mubr.f32.mxu0 0.0
  %163 = vmatmul.mubr.f32.gmra.mxu0 %v77
  %v164 = vpop.f32.mrf.mxu0
  %v165 = vadd.f32 0.0, %v164
  %v166 = vpop.f32.mrf.mxu0
  %167 = vdwg.mxu0
  %168 = vxpose.xlu0.b32.start [1/16] %v150, 128
  %169 = vxpose.xlu0.b32.cont [2/16] %v155, 128
  %170 = vxpose.xlu0.b32.cont [3/16] %v160, 128
  %171 = vxpose.xlu0.b32.cont [4/16] %v165, 128
  %172 = vxpose.xlu0.b32.cont [5/16] 0.0, 128
  %173 = vxpose.xlu0.b32.cont [6/16] 0.0, 128
  %174 = vxpose.xlu0.b32.cont [7/16] 0.0, 128
  %175 = vxpose.xlu0.b32.cont [8/16] 0.0, 128
  %176 = vxpose.xlu0.b32.cont [9/16] 0.0, 128
  %177 = vxpose.xlu0.b32.cont [10/16] 0.0, 128
  %178 = vxpose.xlu0.b32.cont [11/16] 0.0, 128
  %179 = vxpose.xlu0.b32.cont [12/16] 0.0, 128
  %180 = vxpose.xlu0.b32.cont [13/16] 0.0, 128
  %181 = vxpose.xlu0.b32.cont [14/16] 0.0, 128
  %182 = vxpose.xlu0.b32.cont [15/16] 0.0, 128
  %183 = vxpose.xlu0.b32.end [16/16] 0.0, 128
  %v184 = vpop.trf.xlu0
  %v185 = vpop.trf.xlu0
  %v186 = vpop.trf.xlu0
  %v187 = vpop.trf.xlu0
  %v188 = vpop.trf.xlu0
  %v189 = vpop.trf.xlu0
  %v190 = vpop.trf.xlu0
  %v191 = vpop.trf.xlu0
  %v192 = vpop.trf.xlu0
  %v193 = vpop.trf.xlu0
  %v194 = vpop.trf.xlu0
  %v195 = vpop.trf.xlu0
  %v196 = vpop.trf.xlu0
  %v197 = vpop.trf.xlu0
  %v198 = vpop.trf.xlu0
  %v199 = vpop.trf.xlu0
  %v200 = vld [vmem:[%s2] sm:$0x1]
  %v202 = vlaneseq
  %v203 = vshrl.u32 %v202, 7
  %v204 = vsub.s32 0, %v203
  %v205 = vrot.slane %v200, %v204
  %v207 = vadd.f32 %v184, %v205
  %v208 = vadd.f32 %v185, %v205
  %v209 = vadd.f32 %v186, %v205
  %v210 = vadd.f32 %v187, %v205
  %v211 = vadd.f32 %v188, %v205
  %v212 = vadd.f32 %v189, %v205
  %v213 = vadd.f32 %v190, %v205
  %v214 = vadd.f32 %v191, %v205
  %v215 = vadd.f32 %v192, %v205
  %v216 = vadd.f32 %v193, %v205
  %v217 = vadd.f32 %v194, %v205
  %v218 = vadd.f32 %v195, %v205
  %v219 = vadd.f32 %v196, %v205
  %v220 = vadd.f32 %v197, %v205
  %v221 = vadd.f32 %v198, %v205
  %v222 = vadd.f32 %v199, %v205
  %vm223 = vcmask 261120
  %224 = vst.msk [vmem:[%s3] sm:$0xff] %vm223, %v207
  %225 = vst.msk [vmem:[%s3 + $0x8] sm:$0xff] %vm223, %v208
  %226 = vst.msk [vmem:[%s3 + $0x10] sm:$0xff] %vm223, %v209
  %227 = vst.msk [vmem:[%s3 + $0x18] sm:$0xff] %vm223, %v210
  %228 = vst.msk [vmem:[%s3 + $0x20] sm:$0xff] %vm223, %v211
  %229 = vst.msk [vmem:[%s3 + $0x28] sm:$0xff] %vm223, %v212
  %230 = vst.msk [vmem:[%s3 + $0x30] sm:$0xff] %vm223, %v213
  %231 = vst.msk [vmem:[%s3 + $0x38] sm:$0xff] %vm223, %v214
  %232 = vst.msk [vmem:[%s3 + $0x40] sm:$0xff] %vm223, %v215
  %233 = vst.msk [vmem:[%s3 + $0x48] sm:$0xff] %vm223, %v216
  %234 = vst.msk [vmem:[%s3 + $0x50] sm:$0xff] %vm223, %v217
  %235 = vst.msk [vmem:[%s3 + $0x58] sm:$0xff] %vm223, %v218
  %236 = vst.msk [vmem:[%s3 + $0x60] sm:$0xff] %vm223, %v219
  %237 = vst.msk [vmem:[%s3 + $0x68] sm:$0xff] %vm223, %v220
  %238 = vst.msk [vmem:[%s3 + $0x70] sm:$0xff] %vm223, %v221
  %239 = vst.msk [vmem:[%s3 + $0x78] sm:$0xff] %vm223, %v222
  // Predicated region
  $region14: #{tpu_custom_call.1} parent=0 // pred_check
    _
  $region15: #{tpu_custom_call.1} parent=0 // pred_check_branch
    %241 = sbr.rel (0) target = $region17
  $region16: #{tpu_custom_call.1} parent=0 // pred_region
    _
  $region17: #{tpu_custom_call.1} parent=0 // pred_fallthru
    _
  // Predicated region
  $region18: #{tpu_custom_call.1} parent=0 // pred_check
    _
  $region19: #{tpu_custom_call.1} parent=0 // pred_check_branch
    %243 = sbr.rel (0) target = $region21
  $region20: #{tpu_custom_call.1} parent=0 // pred_region
    _
  $region21: #{tpu_custom_call.1} parent=0 // pred_fallthru
    _

</llo_original>
